<compile_context>
chip_gen: v7x
topology: tpu7x:2x2x1
jax: 0.10.0
libtpu: 0.0.40
codegen_flags: <defaults>
</compile_context>

<pallas_src>
import jax
import jax.numpy as jnp
from jax import lax
from jax.experimental import pallas as pl
from jax.experimental.pallas import tpu as pltpu

EPS = 1e-5
_LANE = 128
_SUBLANE = 8
_PAD_FRACTION_MAX = 0.20   # pad 28x28 (14%) / 56x56 (2%); skip 14x14 / 7x7


def _vmem_capacity_bytes():
    try:
        info = pltpu.get_tpu_info()
        for attr in ("vmem_capacity_bytes", "vmem_bytes", "vmem_size_bytes"):
            v = getattr(info, attr, None)
            if v:
                return int(v)
    except Exception:
        pass
    return 64 * 1024 * 1024  # conservative: v7x per-TensorCore VMEM


def _pick_spatial(s, cin_p, cout, vmem_budget):
    """Return (s_pad, sp_tile): padded spatial extent and lane-dense tile size."""
    s_pad = ((s + _LANE - 1) // _LANE) * _LANE
    if s_pad != s and (s_pad - s) / s > _PAD_FRACTION_MAX:
        # Pad fraction too large (e.g. 14x14, 7x7 maps): keep the exact extent;
        # block_shape == full dim is always legal (masked stores, but tiny maps).
        return s, s

    def tile_bytes(t):
        # Pass-B working set: double-buffered bf16 x-in and bf16 out tiles plus
        # the resident bf16 W and f32 shift (counted double-buffered, worst case).
        return 2 * (cin_p * t * 2 + cout * t * 2) + 2 * (cout * cin_p * 2 + cout * 4)

    for t in range(s_pad, 0, -_LANE):
        if s_pad % t == 0 and tile_bytes(t) <= vmem_budget:
            return s_pad, t
    return s_pad, _LANE


def _stats_kernel(x_ref, g_ref, m_ref):
    # Pass A: per-image partial Gram matrix G += X @ X^T (Cin x Cin) and
    # per-channel input sum m += X @ 1 (Cin x 1), accumulated over spatial tiles.
    # Outputs are indexed by the batch grid axis, so the batch axis can be
    # "parallel" (v7x megacore) with no shared-accumulator race.
    @pl.when(pl.program_id(1) == 0)
    def _():
        g_ref[...] = jnp.zeros_like(g_ref)
        m_ref[...] = jnp.zeros_like(m_ref)

    x = x_ref[...]                                   # (Cin_p, sp_tile) bf16
    g_ref[...] += lax.dot_general(                   # MXU, K = sp_tile
        x, x, dimension_numbers=(((1,), (1,)), ((), ())),
        preferred_element_type=jnp.float32)
    m_ref[...] += jnp.sum(x.astype(jnp.float32), axis=-1, keepdims=True)


def _apply_kernel(x_ref, ws_ref, shift_ref, o_ref):
    # Pass B: y = (scale*W) @ x + shift, emitted in bf16 (lane-dense stores).
    y = jnp.dot(ws_ref[...], x_ref[...], preferred_element_type=jnp.float32)
    o_ref[...] = (y + shift_ref[...]).astype(o_ref.dtype)


def shortcut_block(x, weight, bias, gamma, beta, stride, out_dtype=jnp.bfloat16):
    """Forward of ShortcutBlock: BatchNorm2d(Conv2d(x, 1x1, stride)), training mode.

    x: (N, Cin, H, W) NCHW float32. weight: (Cout, Cin, 1, 1).
    Returns (N, Cout, Ho, Wo) in `out_dtype` (bfloat16 by default, per HBM roofline).
    The conv bias is mathematically cancelled by BN's batch-mean subtraction and
    is therefore not fed to the kernels (bit-equivalent forward output).
    """
    del bias
    # TODO(synk): the strided subsample + bf16 cast + pad below is still one
    # standalone XLA prepass over x; fully fusing it into the kernels needs a
    # stride-2 gather on the lane (W) axis, which BlockSpec cannot express.
    xs = x[:, :, ::stride, ::stride]          # strided 1x1 conv only reads this
    n, cin, ho, wo = xs.shape
    cout = weight.shape[0]
    s = ho * wo
    m_total = float(n * s)                    # true sample count (padding excluded)

    cin_p = max(_SUBLANE, ((cin + _SUBLANE - 1) // _SUBLANE) * _SUBLANE)
    vmem_cap = _vmem_capacity_bytes()
    vmem_limit = min(int(vmem_cap * 0.75), 96 * 1024 * 1024)
    s_pad, sp_tile = _pick_spatial(s, cin_p, cout, int(vmem_cap * 0.35))
    n_sp = s_pad // sp_tile

    # NCHW kept end-to-end (contiguous reshape, no transposes); bf16 MXU feed.
    # Zero padding (extra channels / spatial columns) is exact for the stats.
    x3 = jnp.pad(xs.reshape(n, cin, s).astype(jnp.bfloat16),
                 ((0, 0), (0, cin_p - cin), (0, s_pad - s)))

    x_spec = pl.BlockSpec((None, cin_p, sp_tile), lambda i, j: (i, 0, j))

    # ---- Pass A: per-image partial (Gram, sum); batch-parallel (v7x megacore).
    g_part, m_part = pl.pallas_call(
        _stats_kernel,
        out_shape=(jax.ShapeDtypeStruct((n, cin_p, cin_p), jnp.float32),
                   jax.ShapeDtypeStruct((n, cin_p, 1), jnp.float32)),
        grid_spec=pltpu.PrefetchScalarGridSpec(
            num_scalar_prefetch=0,
            grid=(n, n_sp),
            in_specs=[x_spec],
            out_specs=[pl.BlockSpec((None, cin_p, cin_p), lambda i, j: (i, 0, 0)),
                       pl.BlockSpec((None, cin_p, 1), lambda i, j: (i, 0, 0))]),
        compiler_params=pltpu.CompilerParams(
            dimension_semantics=("parallel", "arbitrary"),
            vmem_limit_bytes=vmem_limit),
    )(x3)

    # ---- Finalize (tiny, plain JAX): fold BN into per-channel scale/shift and
    #      fold the scale directly into the weights for pass B.
    wf = jnp.pad(weight[:, :, 0, 0].astype(jnp.bfloat16).astype(jnp.float32),
                 ((0, 0), (0, cin_p - cin)))                      # (Cout, Cin_p)
    g_sum = jnp.sum(g_part, axis=0)                               # (Cin_p, Cin_p)
    m_sum = jnp.sum(m_part, axis=0)                               # (Cin_p, 1)
    ch_sum = wf @ m_sum                                           # sum_s y_c
    ch_sumsq = jnp.sum((wf @ g_sum) * wf, axis=1, keepdims=True)  # sum_s y_c^2
    mean = ch_sum / m_total
    var = jnp.maximum(ch_sumsq / m_total - mean * mean, 0.0)      # cancel guard
    scale = gamma.reshape(cout, 1) * lax.rsqrt(var + EPS)
    shift = beta.reshape(cout, 1) - mean * scale                  # (Cout, 1) f32
    w_scaled = (wf * scale).astype(jnp.bfloat16)                  # (Cout, Cin_p)

    w_spec = pl.BlockSpec((cout, cin_p), lambda i, j: (0, 0))     # VMEM-resident
    row_spec = pl.BlockSpec((cout, 1), lambda i, j: (0, 0))       # VMEM-resident

    # ---- Pass B: y = w_scaled @ x + shift, bf16 lane-dense output, fully parallel.
    out3 = pl.pallas_call(
        _apply_kernel,
        out_shape=jax.ShapeDtypeStruct((n, cout, s_pad), out_dtype),
        grid_spec=pltpu.PrefetchScalarGridSpec(
            num_scalar_prefetch=0,
            grid=(n, n_sp),
            in_specs=[x_spec, w_spec, row_spec],
            out_specs=pl.BlockSpec((None, cout, sp_tile), lambda i, j: (i, 0, j))),
        compiler_params=pltpu.CompilerParams(
            dimension_semantics=("parallel", "parallel"),
            vmem_limit_bytes=vmem_limit),
    )(x3, w_scaled, shift)

    if s_pad != s:
        out3 = out3[:, :, :s]
    return out3.reshape(n, cout, ho, wo)


def _reference(x, weight, bias, gamma, beta, stride):
    # Pure-JAX reference: strided 1x1 conv (+bias) + training-mode BatchNorm2d,
    # f32 math on bf16-rounded x/W to mirror the kernel's MXU feed. The conv
    # bias is kept here to demonstrate that it cancels exactly under BN.
    xs = x[:, :, ::stride, ::stride].astype(jnp.bfloat16).astype(jnp.float32)
    w = weight[:, :, 0, 0].astype(jnp.bfloat16).astype(jnp.float32)
    y = jnp.einsum("nchw,oc->nohw", xs, w) + bias[None, :, None, None]
    mean = jnp.mean(y, axis=(0, 2, 3), keepdims=True)
    var = jnp.mean((y - mean) ** 2, axis=(0, 2, 3), keepdims=True)
    yhat = (y - mean) / jnp.sqrt(var + EPS)
    return yhat * gamma[None, :, None, None] + beta[None, :, None, None]


if __name__ == "__main__":
    # Small shapes consistent with the module: N=2, Cin=4, Cout=8, H=W=16, stride=2.
    n, cin, cout, hw, stride = 2, 4, 8, 16, 2

    key = jax.random.PRNGKey(0)
    kx, kw, kb, kg, kbe = jax.random.split(key, 5)

    x = jax.random.normal(kx, (n, cin, hw, hw), dtype=jnp.float32)
    weight = jax.random.normal(kw, (cout, cin, 1, 1), dtype=jnp.float32) * 0.1
    bias = jax.random.normal(kb, (cout,), dtype=jnp.float32) * 0.1
    gamma = 1.0 + 0.1 * jax.random.normal(kg, (cout,), dtype=jnp.float32)
    beta = 0.1 * jax.random.normal(kbe, (cout,), dtype=jnp.float32)

    fwd = jax.jit(lambda x_, w_, b_, g_, be_: shortcut_block(x_, w_, b_, g_, be_, stride))
    out = jax.block_until_ready(fwd(x, weight, bias, gamma, beta))

    ref = _reference(x, weight, bias, gamma, beta, stride)
    assert out.shape == (n, cout, hw // stride, hw // stride)
    assert out.dtype == jnp.bfloat16
    out_f32 = out.astype(jnp.float32)
    assert jnp.allclose(out_f32, ref, atol=3e-2, rtol=3e-2), (
        "mismatch vs reference: max abs err = "
        f"{float(jnp.max(jnp.abs(out_f32 - ref)))}")

    print("KERNEL_OK")
</pallas_src>

<mosaic_0001>
module attributes {stable_mosaic.version = 11 : i64} {
  func.func @_stats_kernel(%arg0: i32, %arg1: i32, %arg2: memref<1x8x64xbf16, #tpu.memory_space<vmem>>, %arg3: memref<1x8x8xf32, #tpu.memory_space<vmem>>, %arg4: memref<1x8x1xf32, #tpu.memory_space<vmem>>) attributes {dimension_semantics = [#tpu.dimension_semantics<parallel>, #tpu.dimension_semantics<arbitrary>], iteration_bounds = array<i64: 2, 1>, scalar_prefetch = 0 : i64, scratch_operands = 0 : i64, tpu.core_type = #tpu.core_type<tc>, window_params = [{transform_indices = @transform_0, window_bounds = array<i64: 1, 8, 64>}, {transform_indices = @transform_1, window_bounds = array<i64: 1, 8, 8>}, {transform_indices = @transform_2, window_bounds = array<i64: 1, 8, 1>}]} {
    %c0_i32 = arith.constant 0 : i32
    %0 = arith.cmpi eq, %arg1, %c0_i32 : i32
    %1 = arith.extui %0 : i1 to i32
    %c0_i32_0 = arith.constant 0 : i32
    %2 = arith.cmpi ne, %1, %c0_i32_0 : i32
    scf.if %2 {
      %cst_16 = arith.constant 0.000000e+00 : f32
      %21 = vector.broadcast %cst_16 : f32 to vector<8x8xf32>
      %c0_17 = arith.constant 0 : index
      %c0_18 = arith.constant 0 : index
      %c0_19 = arith.constant 0 : index
      %22 = vector.load %arg3[%c0_17, %c0_18, %c0_19] : memref<1x8x8xf32, #tpu.memory_space<vmem>>, vector<1x8x8xf32>
      %23 = vector.shape_cast %22 : vector<1x8x8xf32> to vector<8x8xf32>
      %24 = vector.shape_cast %21 : vector<8x8xf32> to vector<1x8x8xf32>
      tpu.vector_store %arg3[%c0_17, %c0_18, %c0_19], %24 {strides = array<i32>} : memref<1x8x8xf32, #tpu.memory_space<vmem>>, vector<1x8x8xf32>,
      %cst_20 = arith.constant 0.000000e+00 : f32
      %25 = vector.broadcast %cst_20 : f32 to vector<8x1xf32>
      %c0_21 = arith.constant 0 : index
      %c0_22 = arith.constant 0 : index
      %c0_23 = arith.constant 0 : index
      %26 = vector.load %arg4[%c0_21, %c0_22, %c0_23] : memref<1x8x1xf32, #tpu.memory_space<vmem>>, vector<1x8x1xf32>
      %27 = vector.shape_cast %26 : vector<1x8x1xf32> to vector<8x1xf32>
      %28 = vector.shape_cast %25 : vector<8x1xf32> to vector<1x8x1xf32>
      tpu.vector_store %arg4[%c0_21, %c0_22, %c0_23], %28 {strides = array<i32>} : memref<1x8x1xf32, #tpu.memory_space<vmem>>, vector<1x8x1xf32>,
    } else {
    }
    %c0 = arith.constant 0 : index
    %c0_1 = arith.constant 0 : index
    %c0_2 = arith.constant 0 : index
    %3 = vector.load %arg2[%c0, %c0_1, %c0_2] : memref<1x8x64xbf16, #tpu.memory_space<vmem>>, vector<1x8x64xbf16>
    %4 = vector.shape_cast %3 : vector<1x8x64xbf16> to vector<8x64xbf16>
    %c0_3 = arith.constant 0 : index
    %c0_4 = arith.constant 0 : index
    %c0_5 = arith.constant 0 : index
    %5 = vector.load %arg3[%c0_3, %c0_4, %c0_5] : memref<1x8x8xf32, #tpu.memory_space<vmem>>, vector<1x8x8xf32>
    %6 = vector.shape_cast %5 : vector<1x8x8xf32> to vector<8x8xf32>
    %cst = arith.constant dense<0.000000e+00> : vector<8x8xf32>
    %7 = tpu.matmul %4, %4, %cst {dimension_numbers = #tpu.dot_dimension_numbers<[1], [1], [0], [0], [0, 0, 1, 0], [], []>} : vector<8x64xbf16>, vector<8x64xbf16>, vector<8x8xf32> -> vector<8x8xf32>
    %8 = arith.addf %6, %7 : vector<8x8xf32>
    %c0_6 = arith.constant 0 : index
    %c0_7 = arith.constant 0 : index
    %c0_8 = arith.constant 0 : index
    %9 = vector.load %arg3[%c0_6, %c0_7, %c0_8] : memref<1x8x8xf32, #tpu.memory_space<vmem>>, vector<1x8x8xf32>
    %10 = vector.shape_cast %9 : vector<1x8x8xf32> to vector<8x8xf32>
    %11 = vector.shape_cast %8 : vector<8x8xf32> to vector<1x8x8xf32>
    tpu.vector_store %arg3[%c0_6, %c0_7, %c0_8], %11 {strides = array<i32>} : memref<1x8x8xf32, #tpu.memory_space<vmem>>, vector<1x8x8xf32>,
    %c0_9 = arith.constant 0 : index
    %c0_10 = arith.constant 0 : index
    %c0_11 = arith.constant 0 : index
    %12 = vector.load %arg4[%c0_9, %c0_10, %c0_11] : memref<1x8x1xf32, #tpu.memory_space<vmem>>, vector<1x8x1xf32>
    %13 = vector.shape_cast %12 : vector<1x8x1xf32> to vector<8x1xf32>
    %14 = arith.extf %4 : vector<8x64xbf16> to vector<8x64xf32>
    %cst_12 = arith.constant dense<0.000000e+00> : vector<8xf32>
    %15 = vector.multi_reduction <add>, %14, %cst_12 [1] : vector<8x64xf32> to vector<8xf32>
    %16 = vector.shape_cast %15 : vector<8xf32> to vector<8x1xf32>
    %17 = arith.addf %13, %16 : vector<8x1xf32>
    %c0_13 = arith.constant 0 : index
    %c0_14 = arith.constant 0 : index
    %c0_15 = arith.constant 0 : index
    %18 = vector.load %arg4[%c0_13, %c0_14, %c0_15] : memref<1x8x1xf32, #tpu.memory_space<vmem>>, vector<1x8x1xf32>
    %19 = vector.shape_cast %18 : vector<1x8x1xf32> to vector<8x1xf32>
    %20 = vector.shape_cast %17 : vector<8x1xf32> to vector<1x8x1xf32>
    tpu.vector_store %arg4[%c0_13, %c0_14, %c0_15], %20 {strides = array<i32>} : memref<1x8x1xf32, #tpu.memory_space<vmem>>, vector<1x8x1xf32>,
    return
  }
  func.func @transform_0(%arg0: i32, %arg1: i32) -> (i32, i32, i32) {
    %c0_i32 = arith.constant 0 : i32
    %c0_i32_0 = arith.constant 0 : i32
    return %arg0, %c0_i32, %arg1 : i32, i32, i32
  }
  func.func @transform_1(%arg0: i32, %arg1: i32) -> (i32, i32, i32) {
    %c0_i32 = arith.constant 0 : i32
    %c0_i32_0 = arith.constant 0 : i32
    %c0_i32_1 = arith.constant 0 : i32
    return %arg0, %c0_i32, %c0_i32_0 : i32, i32, i32
  }
  func.func @transform_2(%arg0: i32, %arg1: i32) -> (i32, i32, i32) {
    %c0_i32 = arith.constant 0 : i32
    %c0_i32_0 = arith.constant 0 : i32
    %c0_i32_1 = arith.constant 0 : i32
    return %arg0, %c0_i32, %c0_i32_0 : i32, i32, i32
  }
}

module attributes {stable_mosaic.version = 11 : i64} {
  func.func @_apply_kernel(%arg0: i32, %arg1: i32, %arg2: memref<1x8x64xbf16, #tpu.memory_space<vmem>>, %arg3: memref<8x8xbf16, #tpu.memory_space<vmem>>, %arg4: memref<8x1xf32, #tpu.memory_space<vmem>>, %arg5: memref<1x8x64xbf16, #tpu.memory_space<vmem>>) attributes {dimension_semantics = [#tpu.dimension_semantics<parallel>, #tpu.dimension_semantics<parallel>], iteration_bounds = array<i64: 2, 1>, scalar_prefetch = 0 : i64, scratch_operands = 0 : i64, tpu.core_type = #tpu.core_type<tc>, window_params = [{transform_indices = @transform_0, window_bounds = array<i64: 1, 8, 64>}, {pipeline_mode = #tpu.pipeline_mode<synchronous>, transform_indices = @transform_1, window_bounds = array<i64: 8, 8>}, {pipeline_mode = #tpu.pipeline_mode<synchronous>, transform_indices = @transform_2, window_bounds = array<i64: 8, 1>}, {transform_indices = @transform_3, window_bounds = array<i64: 1, 8, 64>}]} {
    %c0 = arith.constant 0 : index
    %c0_0 = arith.constant 0 : index
    %0 = vector.load %arg3[%c0, %c0_0] : memref<8x8xbf16, #tpu.memory_space<vmem>>, vector<8x8xbf16>
    %c0_1 = arith.constant 0 : index
    %c0_2 = arith.constant 0 : index
    %c0_3 = arith.constant 0 : index
    %1 = vector.load %arg2[%c0_1, %c0_2, %c0_3] : memref<1x8x64xbf16, #tpu.memory_space<vmem>>, vector<1x8x64xbf16>
    %2 = vector.shape_cast %1 : vector<1x8x64xbf16> to vector<8x64xbf16>
    %cst = arith.constant dense<0.000000e+00> : vector<8x64xf32>
    %3 = tpu.matmul %0, %2, %cst {dimension_numbers = #tpu.dot_dimension_numbers<[1], [0], [0], [1], [0, 0, 1, 1], [], []>} : vector<8x8xbf16>, vector<8x64xbf16>, vector<8x64xf32> -> vector<8x64xf32>
    %c0_4 = arith.constant 0 : index
    %c0_5 = arith.constant 0 : index
    %4 = vector.load %arg4[%c0_4, %c0_5] : memref<8x1xf32, #tpu.memory_space<vmem>>, vector<8x1xf32>
    %5 = vector.broadcast %4 : vector<8x1xf32> to vector<8x64xf32>
    %6 = arith.addf %3, %5 : vector<8x64xf32>
    %7 = arith.truncf %6 : vector<8x64xf32> to vector<8x64xbf16>
    %c0_6 = arith.constant 0 : index
    %c0_7 = arith.constant 0 : index
    %c0_8 = arith.constant 0 : index
    %8 = vector.load %arg5[%c0_6, %c0_7, %c0_8] : memref<1x8x64xbf16, #tpu.memory_space<vmem>>, vector<1x8x64xbf16>
    %9 = vector.shape_cast %8 : vector<1x8x64xbf16> to vector<8x64xbf16>
    %10 = vector.shape_cast %7 : vector<8x64xbf16> to vector<1x8x64xbf16>
    tpu.vector_store %arg5[%c0_6, %c0_7, %c0_8], %10 {strides = array<i32>} : memref<1x8x64xbf16, #tpu.memory_space<vmem>>, vector<1x8x64xbf16>,
    return
  }
  func.func @transform_0(%arg0: i32, %arg1: i32) -> (i32, i32, i32) {
    %c0_i32 = arith.constant 0 : i32
    %c0_i32_0 = arith.constant 0 : i32
    return %arg0, %c0_i32, %arg1 : i32, i32, i32
  }
  func.func @transform_1(%arg0: i32, %arg1: i32) -> (i32, i32) {
    %c0_i32 = arith.constant 0 : i32
    %c0_i32_0 = arith.constant 0 : i32
    %c0_i32_1 = arith.constant 0 : i32
    return %c0_i32, %c0_i32_0 : i32, i32
  }
  func.func @transform_2(%arg0: i32, %arg1: i32) -> (i32, i32) {
    %c0_i32 = arith.constant 0 : i32
    %c0_i32_0 = arith.constant 0 : i32
    %c0_i32_1 = arith.constant 0 : i32
    return %c0_i32, %c0_i32_0 : i32, i32
  }
  func.func @transform_3(%arg0: i32, %arg1: i32) -> (i32, i32, i32) {
    %c0_i32 = arith.constant 0 : i32
    %c0_i32_0 = arith.constant 0 : i32
    return %arg0, %c0_i32, %arg1 : i32, i32, i32
  }
}

</mosaic_0001>

<llo_original>
// kernel: _lambda_.3
$region0: #{_lambda_.3}
  #allocation0 [shape = 'u32[]', space=smem, size = 0x4, offset = 0x4, fixed_abs, tag = 'smem constant byte address 0x4 - core index']
  #allocation1 [shape = 'u32[144,128]{1,0:T(1,128)}', space=vmem, size = 0x12000, scoped, tag = 'internal scratch']
  %s0 = inlined_call_operand.vmem [shape: bf16[2,8,64], index: 0, kind: input, shape index: {}]
  %s1 = inlined_call_operand.vmem [shape: bf16[8,8], index: 1, kind: input, shape index: {}]
  %s2 = inlined_call_operand.vmem [shape: f32[8,1], index: 2, kind: input, shape index: {}]
  %s3 = inlined_call_operand.vmem [shape: bf16[2,8,64], index: 3, kind: output, shape index: {}]
  %s4 = sld [smem:[#allocation0]]
  $region45: #{_lambda_.3} parent=0
    _
  %s6 = ssub.s32 1, %s4
  %s7 = scalar_select 0, %s6, %s4
  loop: start=0, step=1, limit=4
  $region2: #{_lambda_.3} parent=0 // loop_pre_header
    _
  $region3: #{_lambda_.3} parent=0 // loop_header
    %s9 = sphi 0, %s13
    %p10 = scmp.ge.s32.totalorder %s9, 4
    %s16 = sphi 0, %s28
    %s17 = sphi 0, %s24
    %s18 = sphi 0, %s16
    %s19 = sphi 0, %s17
    %s20 = sphi 0, %s18
    %s21 = sphi 0, %s19
    %s33 = sphi 0, %s35
    %s36 = sphi 0, %s33
    %s37 = sphi 0, %s36
    %s53 = sphi 0, %s37
    %s57 = sphi 0, %s57
    %s59 = sphi 0, %s57
    %s60 = sphi 0, %s59
    %s74 = sphi 0, %s60
    %s78 = sphi 0, %s78
    %s80 = sphi 0, %s78
    %s81 = sphi 0, %s80
    %s95 = sphi 0, %s81
    %s103 = sphi 0, %s105
    %s106 = sphi 0, %s103
    %s107 = sphi 0, %s106
    %s123 = sphi 0, %s107
  $region4: #{_lambda_.3} parent=0 // loop_header_branch
    %12 = sbr.rel (%p10) target = $region8
  $region5: #{_lambda_.3} parent=0 // loop_body
    %s14 = ssub.s32 %s9, 1
    %s15 = ssub.s32 %s9, 2
    %s22 = sadd.s32 1, %s17
    %p23 = scmp.ge.s32.totalorder %s22, 1
    %s24 = scalar_select %p23, 0, %s22
    %s25 = sadd.s32 1, %s16
    %s26 = scalar_select %p23, %s25, %s16
    %p27 = scmp.ge.s32.totalorder %s26, 2
    %s28 = scalar_select %p27, 0, %s26
    %s29 = ssub.s32 %s16, %s28
    %s30 = ssub.s32 %s17, %s24
    %s31 = sor.u32 %s29, %s30
    %p32 = scmp.eq.s32.totalorder %s31, 0
    %s34 = sadd.s32 %s33, 1
    %s35 = scalar_select %p32, %s33, %s34
    %p38 = pneg %p32
    %p39 = scmp.eq.s32.totalorder %s9, 1
    %p40 = por %p38, %p39
    %p41 = scmp.ne.s32.totalorder %s33, %s36
    %p42 = scmp.eq.s32.totalorder %s9, 0
    %p43 = por %p41, %p42
    %p44 = scmp.ne.s32.totalorder %s33, %s36
    %p45 = scmp.eq.s32.totalorder %s14, 1
    %p46 = por %p44, %p45
    %p47 = scmp.ne.s32.totalorder %s36, %s37
    %p48 = scmp.eq.s32.totalorder %s14, 0
    %p49 = por %p47, %p48
    %p50 = scmp.ne.s32.totalorder %s36, %s37
    %p51 = scmp.eq.s32.totalorder %s15, 1
    %p52 = por %p50, %p51
    %p54 = scmp.ne.s32.totalorder %s37, %s53
    %p55 = scmp.eq.s32.totalorder %s15, 0
    %p56 = por %p54, %p55
    %s58 = sadd.s32 %s57, 1
    %p61 = scmp.eq.s32.totalorder %s9, 1
    %p62 = scmp.ne.s32.totalorder %s57, %s59
    %p63 = scmp.eq.s32.totalorder %s9, 0
    %p64 = por %p62, %p63
    %p65 = scmp.ne.s32.totalorder %s57, %s59
    %p66 = scmp.eq.s32.totalorder %s14, 1
    %p67 = por %p65, %p66
    %p68 = scmp.ne.s32.totalorder %s59, %s60
    %p69 = scmp.eq.s32.totalorder %s14, 0
    %p70 = por %p68, %p69
    %p71 = scmp.ne.s32.totalorder %s59, %s60
    %p72 = scmp.eq.s32.totalorder %s15, 1
    %p73 = por %p71, %p72
    %p75 = scmp.ne.s32.totalorder %s60, %s74
    %p76 = scmp.eq.s32.totalorder %s15, 0
    %p77 = por %p75, %p76
    %s79 = sadd.s32 %s78, 1
    %p82 = scmp.eq.s32.totalorder %s9, 1
    %p83 = scmp.ne.s32.totalorder %s78, %s80
    %p84 = scmp.eq.s32.totalorder %s9, 0
    %p85 = por %p83, %p84
    %p86 = scmp.ne.s32.totalorder %s78, %s80
    %p87 = scmp.eq.s32.totalorder %s14, 1
    %p88 = por %p86, %p87
    %p89 = scmp.ne.s32.totalorder %s80, %s81
    %p90 = scmp.eq.s32.totalorder %s14, 0
    %p91 = por %p89, %p90
    %p92 = scmp.ne.s32.totalorder %s80, %s81
    %p93 = scmp.eq.s32.totalorder %s15, 1
    %p94 = por %p92, %p93
    %p96 = scmp.ne.s32.totalorder %s81, %s95
    %p97 = scmp.eq.s32.totalorder %s15, 0
    %p98 = por %p96, %p97
    %s99 = ssub.s32 %s16, %s28
    %s100 = ssub.s32 %s17, %s24
    %s101 = sor.u32 %s99, %s100
    %p102 = scmp.eq.s32.totalorder %s101, 0
    %s104 = sadd.s32 %s103, 1
    %s105 = scalar_select %p102, %s103, %s104
    %p108 = pneg %p102
    %p109 = scmp.eq.s32.totalorder %s9, 1
    %p110 = por %p108, %p109
    %p111 = scmp.ne.s32.totalorder %s103, %s106
    %p112 = scmp.eq.s32.totalorder %s9, 0
    %p113 = por %p111, %p112
    %p114 = scmp.ne.s32.totalorder %s103, %s106
    %p115 = scmp.eq.s32.totalorder %s14, 1
    %p116 = por %p114, %p115
    %p117 = scmp.ne.s32.totalorder %s106, %s107
    %p118 = scmp.eq.s32.totalorder %s14, 0
    %p119 = por %p117, %p118
    %p120 = scmp.ne.s32.totalorder %s106, %s107
    %p121 = scmp.eq.s32.totalorder %s15, 1
    %p122 = por %p120, %p121
    %p124 = scmp.ne.s32.totalorder %s107, %s123
    %p125 = scmp.eq.s32.totalorder %s15, 0
    %p126 = por %p124, %p125
    %p127 = scmp.le.s32.totalorder 1, %s9
    %p128 = scmp.lt.s32.totalorder %s9, 3
    %p129 = pnand %p127, %p128
    %p130 = pneg %p129
    // Predicated region
    $region9: #{_lambda_.3} parent=5 // pred_check
      _
    $region10: #{_lambda_.3} parent=5 // pred_check_branch
      %132 = sbr.rel (%p129) target = $region12
    $region11: #{_lambda_.3} parent=5 // pred_region
      %s133 = ssub.s32 %s9, 1
      // Predicated region
      $region13: #{_lambda_.3} parent=11 // pred_check
        %p134 = pneg %p70
      $region14: #{_lambda_.3} parent=11 // pred_check_branch
        %136 = sbr.rel (%p134) target = $region16
      $region15: #{_lambda_.3} parent=11 // pred_region
        _
      $region16: #{_lambda_.3} parent=11 // pred_fallthru
        _
      // Predicated region
      $region17: #{_lambda_.3} parent=11 // pred_check
        %p137 = pneg %p91
      $region18: #{_lambda_.3} parent=11 // pred_check_branch
        %139 = sbr.rel (%p137) target = $region20
      $region19: #{_lambda_.3} parent=11 // pred_region
        _
      $region20: #{_lambda_.3} parent=11 // pred_fallthru
        _
    $region12: #{_lambda_.3} parent=5 // pred_fallthru
      _
    %p140 = scmp.lt.s32.totalorder %s9, 2
    // Predicated region
    $region21: #{_lambda_.3} parent=5 // pred_check
      %p141 = pneg %p140
    $region22: #{_lambda_.3} parent=5 // pred_check_branch
      %143 = sbr.rel (%p141) target = $region24
    $region23: #{_lambda_.3} parent=5 // pred_region
      // Predicated region
      $region25: #{_lambda_.3} parent=23 // pred_check
        %p144 = pneg %p43
      $region26: #{_lambda_.3} parent=23 // pred_check_branch
        %146 = sbr.rel (%p144) target = $region28
      $region27: #{_lambda_.3} parent=23 // pred_region
        %p147 = scmp.lt.s32.totalorder %s16, 1
        %s148 = scalar_select %p147, %s16, 1
        %p149 = scmp.lt.s32.totalorder %s17, 0
        %s150 = scalar_select %p149, %s17, 0
        %s151 = sadd.s32 %s150, %s148
        %s152 = smul.addr %s151, 4
        %s153 = scalar_lea.vmem %s0, %s152
      $region28: #{_lambda_.3} parent=23 // pred_fallthru
        _
    $region24: #{_lambda_.3} parent=5 // pred_fallthru
      _
    %p154 = scmp.le.s32.totalorder 1, %s9
    %p155 = scmp.lt.s32.totalorder %s9, 3
    %p156 = pnand %p154, %p155
    %p157 = pneg %p156
    // Predicated region
    $region29: #{_lambda_.3} parent=5 // pred_check
      _
    $region30: #{_lambda_.3} parent=5 // pred_check_branch
      %159 = sbr.rel (%p156) target = $region32
    $region31: #{_lambda_.3} parent=5 // pred_region
      %s160 = ssub.s32 %s9, 1
      %p161 = scmp.lt.s32.totalorder %s18, 1
      %s162 = scalar_select %p161, %s18, 1
      %p163 = scmp.lt.s32.totalorder %s19, 0
      %s164 = scalar_select %p163, %s19, 0
      %s165 = sadd.s32 %s164, %s162
      %s166 = smul.addr %s165, 4
      %s167 = scalar_lea.vmem %s0, %s166
      %p168 = pneg %p49
      %p169 = pneg %p46
      %p170 = pneg %p70
      %p171 = pneg %p67
      %p172 = pneg %p91
      %p173 = pneg %p88
      %p174 = pneg %p119
      %p175 = pneg %p116
      %p176 = scmp.lt.s32.totalorder %s18, 1
      %s177 = scalar_select %p176, %s18, 1
      %p178 = scmp.lt.s32.totalorder %s19, 0
      %s179 = scalar_select %p178, %s19, 0
      %s180 = sadd.s32 %s179, %s177
      %s181 = smul.addr %s180, 4
      %s182 = scalar_lea.vmem %s3, %s181
      %p183 = scmp.lt.s32.totalorder %s18, 1
      %s184 = scalar_select %p183, %s18, 1
      %p185 = scmp.lt.s32.totalorder %s19, 0
      %s186 = scalar_select %p185, %s19, 0
      %s187 = sadd.s32 %s186, %s184
      %s188 = smul.addr %s187, 4
      %s189 = scalar_lea.vmem %s0, %s188
      %p190 = scmp.lt.s32.totalorder %s18, 1
      %s191 = scalar_select %p190, %s18, 1
      %p192 = scmp.lt.s32.totalorder %s19, 0
      %s193 = scalar_select %p192, %s19, 0
      %s194 = sadd.s32 %s193, %s191
      %s195 = smul.addr %s194, 4
      %s196 = scalar_lea.vmem %s3, %s195
      %v198 = vld [vmem:[%s1] sm:$0xf]
      %v199 = vld [vmem:[%s189] sm:$0xf]
      %v200 = vld [vmem:[%s2] sm:$0xff]
      %202 = vset.pattern.permute.xlu0 0
      %203 = vperm.xlu0 %202, %v200
      %v204 = vpop.permute.xlu0 %203
      %vm206 = vcmask 64512
      %v208 = vsel %vm206, %v198, 0
      %vm210 = vcmask 1043456
      %v212 = vsel %vm210, %v199, 0
      %214 = vmatprep.subr.bf16.mxu0 0
      %215 = vmatpush1.bf16.msra.mxu0 %v212
      %216 = vmatprep.subr.bf16.mxu0 0
      %217 = vmatpush1.bf16.msra.mxu0 0
      %218 = vmatprep.subr.bf16.mxu0 0
      %219 = vmatpush1.bf16.msra.mxu0 0
      %220 = vmatprep.subr.bf16.mxu0 0
      %221 = vmatpush1.bf16.msra.mxu0 0
      %222 = vmatprep.subr.bf16.mxu0 0
      %223 = vmatpush1.bf16.msra.mxu0 0
      %224 = vmatprep.subr.bf16.mxu0 0
      %225 = vmatpush1.bf16.msra.mxu0 0
      %226 = vmatprep.subr.bf16.mxu0 0
      %227 = vmatpush1.bf16.msra.mxu0 0
      %228 = vmatprep.subr.bf16.mxu0 0
      %229 = vmatpush1.bf16.msra.mxu0 0
      %230 = vmatprep.subr.bf16.mxu0 0
      %231 = vmatpush1.bf16.msra.mxu0 0
      %232 = vmatprep.subr.bf16.mxu0 0
      %233 = vmatpush1.bf16.msra.mxu0 0
      %234 = vmatprep.subr.bf16.mxu0 0
      %235 = vmatpush1.bf16.msra.mxu0 0
      %236 = vmatprep.subr.bf16.mxu0 0
      %237 = vmatpush1.bf16.msra.mxu0 0
      %238 = vmatprep.subr.bf16.mxu0 0
      %239 = vmatpush1.bf16.msra.mxu0 0
      %240 = vmatprep.subr.bf16.mxu0 0
      %241 = vmatpush1.bf16.msra.mxu0 0
      %242 = vmatprep.subr.bf16.mxu0 0
      %243 = vmatpush1.bf16.msra.mxu0 0
      %244 = vmatprep.subr.bf16.mxu0 0
      %245 = vmatpush1.bf16.msra.mxu0 0
      %246 = vmatprep.mubr.bf16.mxu0 0
      %247 = vmatmul.mubr.bf16.gmra.mrb[0].mxu0 %v208
      %v248 = vpop.f32.mrb[0].mxu0
      %v249 = vadd.f32 %v204, %v248
      %v250 = vpop.f32.mrb[0].mxu0
      %v251 = vpop.f32.mrb[0].mxu0
      %v252 = vpop.f32.mrb[0].mxu0
      %253 = vdwg.mxu0
      %v254 = vpack.c.bf16 %v249, %v249
      %vm255 = vcmask 519168
      %256 = vst.msk [vmem:[%s196] sm:$0xf] %vm255, %v254
      %p257 = scmp.lt.s32.totalorder %s18, 1
      %s258 = scalar_select %p257, %s18, 1
      %p259 = scmp.lt.s32.totalorder %s19, 0
      %s260 = scalar_select %p259, %s19, 0
      %s261 = sadd.s32 %s260, %s258
      %s262 = smul.addr %s261, 4
      %s263 = scalar_lea.vmem %s3, %s262
      // Predicated region
      $region33: #{_lambda_.3} parent=31 // pred_check
        %p264 = pneg %p116
      $region34: #{_lambda_.3} parent=31 // pred_check_branch
        %266 = sbr.rel (%p264) target = $region36
      $region35: #{_lambda_.3} parent=31 // pred_region
        _
      $region36: #{_lambda_.3} parent=31 // pred_fallthru
        _
    $region32: #{_lambda_.3} parent=5 // pred_fallthru
      _
    %p267 = scmp.le.s32.totalorder 2, %s9
    // Predicated region
    $region37: #{_lambda_.3} parent=5 // pred_check
      %p268 = pneg %p267
    $region38: #{_lambda_.3} parent=5 // pred_check_branch
      %270 = sbr.rel (%p268) target = $region40
    $region39: #{_lambda_.3} parent=5 // pred_region
      %s271 = ssub.s32 %s9, 2
      // Predicated region
      $region41: #{_lambda_.3} parent=39 // pred_check
        %p272 = pneg %p122
      $region42: #{_lambda_.3} parent=39 // pred_check_branch
        %274 = sbr.rel (%p272) target = $region44
      $region43: #{_lambda_.3} parent=39 // pred_region
        %p275 = scmp.lt.s32.totalorder %s20, 1
        %s276 = scalar_select %p275, %s20, 1
        %p277 = scmp.lt.s32.totalorder %s21, 0
        %s278 = scalar_select %p277, %s21, 0
        %s279 = sadd.s32 %s278, %s276
        %s280 = smul.addr %s279, 4
        %s281 = scalar_lea.vmem %s3, %s280
      $region44: #{_lambda_.3} parent=39 // pred_fallthru
        _
    $region40: #{_lambda_.3} parent=5 // pred_fallthru
      _
  $region6: #{_lambda_.3} parent=0 // loop_footer
    %s13 = sadd.s32 1, %s9
  $region7: #{_lambda_.3} parent=0 // loop_footer_branch
    %8 = sbr.rel target = $region3
  $region8: #{_lambda_.3} parent=0 // loop_exit
    _

// kernel: _lambda_.2
$region0: #{_lambda_.2}
  #allocation0 [shape = 'u32[]', space=smem, size = 0x4, offset = 0x4, fixed_abs, tag = 'smem constant byte address 0x4 - core index']
  #allocation1 [shape = 'u32[144,128]{1,0:T(1,128)}', space=vmem, size = 0x12000, scoped, tag = 'internal scratch']
  %s0 = inlined_call_operand.vmem [shape: bf16[2,8,64], index: 0, kind: input, shape index: {}]
  %s1 = inlined_call_operand.vmem [shape: f32[2,8,8], index: 1, kind: output, shape index: {0}]
  %s2 = inlined_call_operand.vmem [shape: f32[2,8,1], index: 2, kind: output, shape index: {1}]
  %3 = xla_tuple %s1, %s2
  %s4 = sld [smem:[#allocation0]]
  $region49: #{_lambda_.2} parent=0
    _
  %s6 = ssub.s32 1, %s4
  %s7 = scalar_select 0, %s6, %s4
  loop: start=0, step=1, limit=4
  $region2: #{_lambda_.2} parent=0 // loop_pre_header
    _
  $region3: #{_lambda_.2} parent=0 // loop_header
    %s9 = sphi 0, %s13
    %p10 = scmp.ge.s32.totalorder %s9, 4
    %s16 = sphi 0, %s28
    %s17 = sphi 0, %s24
    %s18 = sphi 0, %s16
    %s19 = sphi 0, %s17
    %s20 = sphi 0, %s18
    %s21 = sphi 0, %s19
    %s33 = sphi 0, %s35
    %s36 = sphi 0, %s33
    %s37 = sphi 0, %s36
    %s53 = sphi 0, %s37
    %s59 = sphi 0, %s61
    %s62 = sphi 0, %s59
    %s63 = sphi 0, %s62
    %s79 = sphi 0, %s63
    %s85 = sphi 0, %s87
    %s88 = sphi 0, %s85
    %s89 = sphi 0, %s88
    %s105 = sphi 0, %s89
  $region4: #{_lambda_.2} parent=0 // loop_header_branch
    %12 = sbr.rel (%p10) target = $region8
  $region5: #{_lambda_.2} parent=0 // loop_body
    %s14 = ssub.s32 %s9, 1
    %s15 = ssub.s32 %s9, 2
    %s22 = sadd.s32 1, %s17
    %p23 = scmp.ge.s32.totalorder %s22, 1
    %s24 = scalar_select %p23, 0, %s22
    %s25 = sadd.s32 1, %s16
    %s26 = scalar_select %p23, %s25, %s16
    %p27 = scmp.ge.s32.totalorder %s26, 2
    %s28 = scalar_select %p27, 0, %s26
    %s29 = ssub.s32 %s16, %s28
    %s30 = ssub.s32 %s17, %s24
    %s31 = sor.u32 %s29, %s30
    %p32 = scmp.eq.s32.totalorder %s31, 0
    %s34 = sadd.s32 %s33, 1
    %s35 = scalar_select %p32, %s33, %s34
    %p38 = pneg %p32
    %p39 = scmp.eq.s32.totalorder %s9, 1
    %p40 = por %p38, %p39
    %p41 = scmp.ne.s32.totalorder %s33, %s36
    %p42 = scmp.eq.s32.totalorder %s9, 0
    %p43 = por %p41, %p42
    %p44 = scmp.ne.s32.totalorder %s33, %s36
    %p45 = scmp.eq.s32.totalorder %s14, 1
    %p46 = por %p44, %p45
    %p47 = scmp.ne.s32.totalorder %s36, %s37
    %p48 = scmp.eq.s32.totalorder %s14, 0
    %p49 = por %p47, %p48
    %p50 = scmp.ne.s32.totalorder %s36, %s37
    %p51 = scmp.eq.s32.totalorder %s15, 1
    %p52 = por %p50, %p51
    %p54 = scmp.ne.s32.totalorder %s37, %s53
    %p55 = scmp.eq.s32.totalorder %s15, 0
    %p56 = por %p54, %p55
    %s57 = ssub.s32 %s16, %s28
    %p58 = scmp.eq.s32.totalorder %s57, 0
    %s60 = sadd.s32 %s59, 1
    %s61 = scalar_select %p58, %s59, %s60
    %p64 = pneg %p58
    %p65 = scmp.eq.s32.totalorder %s9, 1
    %p66 = por %p64, %p65
    %p67 = scmp.ne.s32.totalorder %s59, %s62
    %p68 = scmp.eq.s32.totalorder %s9, 0
    %p69 = por %p67, %p68
    %p70 = scmp.ne.s32.totalorder %s59, %s62
    %p71 = scmp.eq.s32.totalorder %s14, 1
    %p72 = por %p70, %p71
    %p73 = scmp.ne.s32.totalorder %s62, %s63
    %p74 = scmp.eq.s32.totalorder %s14, 0
    %p75 = por %p73, %p74
    %p76 = scmp.ne.s32.totalorder %s62, %s63
    %p77 = scmp.eq.s32.totalorder %s15, 1
    %p78 = por %p76, %p77
    %p80 = scmp.ne.s32.totalorder %s63, %s79
    %p81 = scmp.eq.s32.totalorder %s15, 0
    %p82 = por %p80, %p81
    %s83 = ssub.s32 %s16, %s28
    %p84 = scmp.eq.s32.totalorder %s83, 0
    %s86 = sadd.s32 %s85, 1
    %s87 = scalar_select %p84, %s85, %s86
    %p90 = pneg %p84
    %p91 = scmp.eq.s32.totalorder %s9, 1
    %p92 = por %p90, %p91
    %p93 = scmp.ne.s32.totalorder %s85, %s88
    %p94 = scmp.eq.s32.totalorder %s9, 0
    %p95 = por %p93, %p94
    %p96 = scmp.ne.s32.totalorder %s85, %s88
    %p97 = scmp.eq.s32.totalorder %s14, 1
    %p98 = por %p96, %p97
    %p99 = scmp.ne.s32.totalorder %s88, %s89
    %p100 = scmp.eq.s32.totalorder %s14, 0
    %p101 = por %p99, %p100
    %p102 = scmp.ne.s32.totalorder %s88, %s89
    %p103 = scmp.eq.s32.totalorder %s15, 1
    %p104 = por %p102, %p103
    %p106 = scmp.ne.s32.totalorder %s89, %s105
    %p107 = scmp.eq.s32.totalorder %s15, 0
    %p108 = por %p106, %p107
    %p109 = scmp.le.s32.totalorder 1, %s9
    %p110 = scmp.lt.s32.totalorder %s9, 3
    %p111 = pnand %p109, %p110
    %p112 = pneg %p111
    // Predicated region
    $region9: #{_lambda_.2} parent=5 // pred_check
      _
    $region10: #{_lambda_.2} parent=5 // pred_check_branch
      %114 = sbr.rel (%p111) target = $region12
    $region11: #{_lambda_.2} parent=5 // pred_region
      %s115 = ssub.s32 %s9, 1
    $region12: #{_lambda_.2} parent=5 // pred_fallthru
      _
    %p116 = scmp.lt.s32.totalorder %s9, 2
    // Predicated region
    $region13: #{_lambda_.2} parent=5 // pred_check
      %p117 = pneg %p116
    $region14: #{_lambda_.2} parent=5 // pred_check_branch
      %119 = sbr.rel (%p117) target = $region16
    $region15: #{_lambda_.2} parent=5 // pred_region
      // Predicated region
      $region17: #{_lambda_.2} parent=15 // pred_check
        %p120 = pneg %p43
      $region18: #{_lambda_.2} parent=15 // pred_check_branch
        %122 = sbr.rel (%p120) target = $region20
      $region19: #{_lambda_.2} parent=15 // pred_region
        %p123 = scmp.lt.s32.totalorder %s16, 1
        %s124 = scalar_select %p123, %s16, 1
        %p125 = scmp.lt.s32.totalorder %s17, 0
        %s126 = scalar_select %p125, %s17, 0
        %s127 = sadd.s32 %s126, %s124
        %s128 = smul.addr %s127, 4
        %s129 = scalar_lea.vmem %s0, %s128
      $region20: #{_lambda_.2} parent=15 // pred_fallthru
        _
    $region16: #{_lambda_.2} parent=5 // pred_fallthru
      _
    %p130 = scmp.le.s32.totalorder 1, %s9
    %p131 = scmp.lt.s32.totalorder %s9, 3
    %p132 = pnand %p130, %p131
    %p133 = pneg %p132
    // Predicated region
    $region21: #{_lambda_.2} parent=5 // pred_check
      _
    $region22: #{_lambda_.2} parent=5 // pred_check_branch
      %135 = sbr.rel (%p132) target = $region24
    $region23: #{_lambda_.2} parent=5 // pred_region
      %s136 = ssub.s32 %s9, 1
      %p137 = scmp.lt.s32.totalorder %s18, 1
      %s138 = scalar_select %p137, %s18, 1
      %p139 = scmp.lt.s32.totalorder %s19, 0
      %s140 = scalar_select %p139, %s19, 0
      %s141 = sadd.s32 %s140, %s138
      %s142 = smul.addr %s141, 4
      %s143 = scalar_lea.vmem %s0, %s142
      %p144 = pneg %p49
      %p145 = pneg %p46
      %p146 = pneg %p75
      %p147 = pneg %p72
      %p148 = scmp.lt.s32.totalorder %s18, 1
      %s149 = scalar_select %p148, %s18, 1
      %s150 = smul.addr %s149, 8
      %s151 = scalar_lea.vmem %s1, %s150
      %p152 = pneg %p101
      %p153 = pneg %p98
      %p154 = scmp.lt.s32.totalorder %s18, 1
      %s155 = scalar_select %p154, %s18, 1
      %s156 = smul.addr %s155, 8
      %s157 = scalar_lea.vmem %s2, %s156
      %p158 = scmp.lt.s32.totalorder %s18, 1
      %s159 = scalar_select %p158, %s18, 1
      %p160 = scmp.lt.s32.totalorder %s19, 0
      %s161 = scalar_select %p160, %s19, 0
      %s162 = sadd.s32 %s161, %s159
      %s163 = smul.addr %s162, 4
      %s164 = scalar_lea.vmem %s0, %s163
      %p165 = scmp.lt.s32.totalorder %s18, 1
      %s166 = scalar_select %p165, %s18, 1
      %s167 = smul.addr %s166, 8
      %s168 = scalar_lea.vmem %s1, %s167
      %p169 = scmp.lt.s32.totalorder %s18, 1
      %s170 = scalar_select %p169, %s18, 1
      %s171 = smul.addr %s170, 8
      %s172 = scalar_lea.vmem %s2, %s171
      %p174 = scmp.eq.s32.totalorder %s19, 0
      // Predicated region
      $region25: #{_lambda_.2} parent=23 // pred_check
        %p175 = pneg %p174
      $region26: #{_lambda_.2} parent=23 // pred_check_branch
        %177 = sbr.rel (%p175) target = $region28
      $region27: #{_lambda_.2} parent=23 // pred_region
        %vm178 = vcmask 64512
        %179 = vst.msk [vmem:[%s168] sm:$0xff] %vm178, 0.0
        %vm180 = vcmask 7168
        %181 = vst.msk [vmem:[%s172] sm:$0xff] %vm180, 0.0
      $region28: #{_lambda_.2} parent=23 // pred_fallthru
        _
      %v182 = vld [vmem:[%s164] sm:$0xf]
      %v183 = vld [vmem:[%s168] sm:$0xff]
      %vm184 = vcmask 523264
      %v186 = vsel %vm184, %v182, 0
      %188 = vmatprep.subr.bf16.mxu0 0
      %189 = vmatpush1.bf16.xpose.msra.mxu0 %v186
      %190 = vmatprep.subr.bf16.mxu0 0
      %191 = vmatpush1.bf16.xpose.msra.mxu0 0
      %192 = vmatprep.subr.bf16.mxu0 0
      %193 = vmatpush1.bf16.xpose.msra.mxu0 0
      %194 = vmatprep.subr.bf16.mxu0 0
      %195 = vmatpush1.bf16.xpose.msra.mxu0 0
      %196 = vmatprep.subr.bf16.mxu0 0
      %197 = vmatpush1.bf16.xpose.msra.mxu0 0
      %198 = vmatprep.subr.bf16.mxu0 0
      %199 = vmatpush1.bf16.xpose.msra.mxu0 0
      %200 = vmatprep.subr.bf16.mxu0 0
      %201 = vmatpush1.bf16.xpose.msra.mxu0 0
      %202 = vmatprep.subr.bf16.mxu0 0
      %203 = vmatpush1.bf16.xpose.msra.mxu0 0
      %204 = vmatprep.subr.bf16.mxu0 0
      %205 = vmatpush1.bf16.xpose.msra.mxu0 0
      %206 = vmatprep.subr.bf16.mxu0 0
      %207 = vmatpush1.bf16.xpose.msra.mxu0 0
      %208 = vmatprep.subr.bf16.mxu0 0
      %209 = vmatpush1.bf16.xpose.msra.mxu0 0
      %210 = vmatprep.subr.bf16.mxu0 0
      %211 = vmatpush1.bf16.xpose.msra.mxu0 0
      %212 = vmatprep.subr.bf16.mxu0 0
      %213 = vmatpush1.bf16.xpose.msra.mxu0 0
      %214 = vmatprep.subr.bf16.mxu0 0
      %215 = vmatpush1.bf16.xpose.msra.mxu0 0
      %216 = vmatprep.subr.bf16.mxu0 0
      %217 = vmatpush1.bf16.xpose.msra.mxu0 0
      %218 = vmatprep.subr.bf16.mxu0 0
      %219 = vmatpush1.bf16.xpose.msra.mxu0 0
      %220 = vmatprep.mubr.bf16.mxu0 0
      %221 = vmatmul.mubr.bf16.gmra.mrb[0].mxu0 %v186
      %v222 = vpop.f32.mrb[0].mxu0
      %v223 = vadd.f32 0.0, %v222
      %v224 = vpop.f32.mrb[0].mxu0
      %v225 = vpop.f32.mrb[0].mxu0
      %v226 = vpop.f32.mrb[0].mxu0
      %227 = vdwg.mxu0
      %v228 = vadd.f32 %v183, %v223
      %vm229 = vcmask 64512
      %230 = vst.msk [vmem:[%s168] sm:$0xff] %vm229, %v228
      %v231 = vld [vmem:[%s172] sm:$0xff]
      %v232 = vunpack.c.l.bf16 %v182
      %v233 = vsel %vm184, %v232, 0.0
      %234 = vadd.xlane.f32.xlu0 %v233
      %v235 = vpop.xlane.xlu0 %234
      %v236 = vadd.f32 %v231, %v235
      %vm237 = vcmask 7168
      %238 = vst.msk [vmem:[%s172] sm:$0xff] %vm237, %v236
      %p239 = scmp.lt.s32.totalorder %s18, 1
      %s240 = scalar_select %p239, %s18, 1
      %s241 = smul.addr %s240, 8
      %s242 = scalar_lea.vmem %s1, %s241
      %p243 = scmp.lt.s32.totalorder %s18, 1
      %s244 = scalar_select %p243, %s18, 1
      %s245 = smul.addr %s244, 8
      %s246 = scalar_lea.vmem %s2, %s245
      // Predicated region
      $region29: #{_lambda_.2} parent=23 // pred_check
        %p247 = pneg %p72
      $region30: #{_lambda_.2} parent=23 // pred_check_branch
        %249 = sbr.rel (%p247) target = $region32
      $region31: #{_lambda_.2} parent=23 // pred_region
        _
      $region32: #{_lambda_.2} parent=23 // pred_fallthru
        _
      // Predicated region
      $region33: #{_lambda_.2} parent=23 // pred_check
        %p250 = pneg %p98
      $region34: #{_lambda_.2} parent=23 // pred_check_branch
        %252 = sbr.rel (%p250) target = $region36
      $region35: #{_lambda_.2} parent=23 // pred_region
        _
      $region36: #{_lambda_.2} parent=23 // pred_fallthru
        _
    $region24: #{_lambda_.2} parent=5 // pred_fallthru
      _
    %p253 = scmp.le.s32.totalorder 2, %s9
    // Predicated region
    $region37: #{_lambda_.2} parent=5 // pred_check
      %p254 = pneg %p253
    $region38: #{_lambda_.2} parent=5 // pred_check_branch
      %256 = sbr.rel (%p254) target = $region40
    $region39: #{_lambda_.2} parent=5 // pred_region
      %s257 = ssub.s32 %s9, 2
      // Predicated region
      $region41: #{_lambda_.2} parent=39 // pred_check
        %p258 = pneg %p78
      $region42: #{_lambda_.2} parent=39 // pred_check_branch
        %260 = sbr.rel (%p258) target = $region44
      $region43: #{_lambda_.2} parent=39 // pred_region
        %p261 = scmp.lt.s32.totalorder %s20, 1
        %s262 = scalar_select %p261, %s20, 1
        %s263 = smul.addr %s262, 8
        %s264 = scalar_lea.vmem %s1, %s263
      $region44: #{_lambda_.2} parent=39 // pred_fallthru
        _
      // Predicated region
      $region45: #{_lambda_.2} parent=39 // pred_check
        %p265 = pneg %p104
      $region46: #{_lambda_.2} parent=39 // pred_check_branch
        %267 = sbr.rel (%p265) target = $region48
      $region47: #{_lambda_.2} parent=39 // pred_region
        %p268 = scmp.lt.s32.totalorder %s20, 1
        %s269 = scalar_select %p268, %s20, 1
        %s270 = smul.addr %s269, 8
        %s271 = scalar_lea.vmem %s2, %s270
      $region48: #{_lambda_.2} parent=39 // pred_fallthru
        _
    $region40: #{_lambda_.2} parent=5 // pred_fallthru
      _
  $region6: #{_lambda_.2} parent=0 // loop_footer
    %s13 = sadd.s32 1, %s9
  $region7: #{_lambda_.2} parent=0 // loop_footer_branch
    %8 = sbr.rel target = $region3
  $region8: #{_lambda_.2} parent=0 // loop_exit
    _

</llo_original>
